<compile_context>
chip_gen: v7x
topology: tpu7x:2x2x1
jax: 0.10.0
libtpu: 0.0.40
codegen_flags: <defaults>
</compile_context>

<pallas_src>
import math

import jax
import jax.numpy as jnp
from jax.experimental import pallas as pl
from jax.experimental.pallas import tpu as pltpu


# ---------------------------------------------------------------------------
# Parameter / buffer construction (plain JAX glue, matches __init__)
# ---------------------------------------------------------------------------
def make_positional_encoding_buffer(
    d_model: int, max_len: int = 5000, dtype=jnp.float32
) -> jnp.ndarray:
    """Builds the `pe` buffer exactly as the PyTorch __init__ does.

    Returns pe with shape [max_len, 1, d_model].  `dtype` lets the model store
    the buffer in its compute dtype once at init (avoids per-call casts).
    """
    position = jnp.arange(max_len, dtype=jnp.float32)[:, None]            # (max_len, 1)
    div_term = jnp.exp(
        jnp.arange(0, d_model, 2, dtype=jnp.float32)
        * -(math.log(10000.0) / d_model)
    )                                                                      # (d_model//2,)
    angles = position * div_term                                           # (max_len, d_model//2)
    pe = jnp.zeros((max_len, d_model), dtype=jnp.float32)
    pe = pe.at[:, 0::2].set(jnp.sin(angles))
    pe = pe.at[:, 1::2].set(jnp.cos(angles))
    return pe[:, None, :].astype(dtype)                                    # (max_len, 1, d_model)


# ---------------------------------------------------------------------------
# Pallas kernels
# ---------------------------------------------------------------------------
def _pe_add_bcast_kernel(x_ref, pe_ref, o_ref):
    # x_ref / o_ref : (ts, B, dc)   pe_ref : (ts, 1, dc)
    # Batch broadcast = sublane replicate of pe over the B axis (near-free).
    pe = pe_ref[...]
    if pe.dtype != x_ref.dtype:
        pe = pe.astype(x_ref.dtype)           # tiny in-kernel VPU cast
    o_ref[...] = x_ref[...] + pe


def _pe_add_flat_kernel(x_ref, pe_ref, o_ref):
    # Lane-dense same-shape add: (ts, Wf) + (ts, Wf).
    o_ref[...] = x_ref[...] + pe_ref[...]


# ---------------------------------------------------------------------------
# Tiling helpers
# ---------------------------------------------------------------------------
_SUBLANE = {4: 8, 2: 16, 1: 32}     # itemsize -> sublane granularity


def _vmem_capacity_bytes() -> int:
    try:
        info = pltpu.get_tpu_info()
        cap = getattr(info, "vmem_capacity_bytes", None)
        if cap:
            return int(cap)
    except Exception:
        pass
    return 64 << 20                  # conservative default (v7x per-TensorCore)


def _pick_row_tile(n_rows: int, row_bytes: int, sublane: int,
                   target_tile_bytes: int, override=None) -> int:
    """Pick the tile length along the (possibly folded) row axis."""
    if override is not None:
        ts = min(int(override), n_rows)
        if ts < n_rows:
            ts = max(sublane, ts - ts % sublane)
        return ts
    ts = max(sublane, target_tile_bytes // max(row_bytes, 1))
    ts = max(sublane, ts - ts % sublane)
    if ts >= n_rows:
        # Whole extent fits in one tile.  If possible, split in two so a
        # 2-TensorCore part (v7x) can shard the "parallel" grid across cores.
        if n_rows >= 2 * sublane:
            half = -(-n_rows // 2)
            ts = half + (-half % sublane)
        else:
            ts = n_rows
    return ts


# ---------------------------------------------------------------------------
# Forward pass
# ---------------------------------------------------------------------------
def positional_encoding_forward(
    x: jnp.ndarray,
    pe: jnp.ndarray,
    *,
    row_tile: int | None = None,
    target_tile_bytes: int | None = None,
) -> jnp.ndarray:
    """Forward: x + pe[:S] (broadcast over batch); dropout = identity (eval).

    x : [S, B, D]     pe: [max_len, 1, D]
    """
    S, B, D = x.shape
    dtype = x.dtype
    itemsize = jnp.dtype(dtype).itemsize
    sublane = _SUBLANE.get(itemsize, 8)

    cap = _vmem_capacity_bytes()
    vmem_ceiling = max(32 << 20, int(0.75 * cap))       # 48 MiB on v7x, 96 MiB on v5e/v6e
    headroom = 8 << 20
    if target_tile_bytes is None:
        # ~6 buffers live (x, pe, out; each double-buffered) must fit the ceiling.
        target_tile_bytes = max(2 << 20,
                                min(12 << 20, (int(0.72 * cap) - headroom) // 6))

    if D % 128 == 0:
        # ------------------- 3-D sublane-broadcast path ---------------------
        row_bytes = B * D * itemsize
        ts = _pick_row_tile(S, row_bytes, sublane, target_tile_bytes, row_tile)
        num_s = pl.cdiv(S, ts)
        # Short-S / wide-D: add a lane-axis grid split so v7x's 2nd core has work.
        dc = D // 2 if (num_s < 2 and D % 256 == 0) else D
        num_d = D // dc

        pe_itemsize = jnp.dtype(pe.dtype).itemsize
        vmem_need = 2 * ts * (2 * B * dc * itemsize + dc * pe_itemsize)
        vmem_limit = int(min(max(vmem_need + headroom, 32 << 20), vmem_ceiling))

        return pl.pallas_call(
            _pe_add_bcast_kernel,
            out_shape=jax.ShapeDtypeStruct((S, B, D), dtype),
            grid_spec=pltpu.PrefetchScalarGridSpec(
                num_scalar_prefetch=0,
                grid=(num_s, num_d),
                in_specs=[
                    pl.BlockSpec((ts, B, dc), lambda i, j: (i, 0, j)),
                    # Full pe buffer passed; BlockSpec does the pe[:S] slicing.
                    pl.BlockSpec((ts, 1, dc), lambda i, j: (i, 0, j)),
                ],
                out_specs=pl.BlockSpec((ts, B, dc), lambda i, j: (i, 0, j)),
            ),
            compiler_params=pltpu.CompilerParams(
                dimension_semantics=("parallel", "parallel"),
                vmem_limit_bytes=vmem_limit,
            ),
        )(x, pe)

    # ---------------------- lane-dense fallback (small D) -------------------
    W = B * D
    if W % 128 == 0 or S < 2:
        r = 1
    else:
        r = 128 // math.gcd(W, 128)
        if S % r != 0:
            r = 1        # TODO(synk): could pad S instead of accepting masked lanes
    rows = S // r
    Wf = r * W

    # Free contiguous 2-D view of x; pe slab matching it is built once per
    # call (negligible bytes for the small-D shapes that hit this path).
    x2 = x.reshape(rows, Wf)
    pe_rows = pe[:S, 0, :].astype(dtype)                                    # (S, D)
    pe_slab = jnp.broadcast_to(pe_rows[:, None, :], (S, B, D)).reshape(rows, Wf)

    row_bytes = Wf * itemsize
    ts = _pick_row_tile(rows, row_bytes, sublane, target_tile_bytes, row_tile)
    grid = (pl.cdiv(rows, ts),)
    vmem_need = 6 * ts * row_bytes
    vmem_limit = int(min(max(vmem_need + headroom, 32 << 20), vmem_ceiling))

    out2 = pl.pallas_call(
        _pe_add_flat_kernel,
        out_shape=jax.ShapeDtypeStruct((rows, Wf), dtype),
        grid_spec=pltpu.PrefetchScalarGridSpec(
            num_scalar_prefetch=0,
            grid=grid,
            in_specs=[
                pl.BlockSpec((ts, Wf), lambda i: (i, 0)),
                pl.BlockSpec((ts, Wf), lambda i: (i, 0)),
            ],
            out_specs=pl.BlockSpec((ts, Wf), lambda i: (i, 0)),
        ),
        compiler_params=pltpu.CompilerParams(
            dimension_semantics=("parallel",),
            vmem_limit_bytes=vmem_limit,
        ),
    )(x2, pe_slab)
    return out2.reshape(S, B, D)


# ---------------------------------------------------------------------------
# Reference (pure JAX) for sanity checks
# ---------------------------------------------------------------------------
def positional_encoding_ref(x: jnp.ndarray, pe: jnp.ndarray) -> jnp.ndarray:
    return x + pe[: x.shape[0]].astype(x.dtype)


if __name__ == "__main__":
    max_len = 64          # small synthetic max_len (module default is 5000)
    batch = 2

    key = jax.random.PRNGKey(0)
    k1, k2, k3, k4, k5 = jax.random.split(key, 5)

    # --- check 1: small D (fallback, rows folded into lanes), single tile ---
    d_model = 32
    pe32 = make_positional_encoding_buffer(d_model, max_len)
    x = jax.random.normal(k1, (8, batch, d_model), dtype=jnp.float32)
    out = jax.block_until_ready(positional_encoding_forward(x, pe32))
    ref = positional_encoding_ref(x, pe32)
    assert out.shape == x.shape
    assert jnp.allclose(out, ref, atol=1e-6, rtol=1e-6)

    # --- check 2: fallback path, multi-step grid with ragged last tile ------
    x = jax.random.normal(k2, (24, batch, d_model), dtype=jnp.float32)
    out = jax.block_until_ready(positional_encoding_forward(x, pe32, row_tile=8))
    ref = positional_encoding_ref(x, pe32)
    assert jnp.allclose(out, ref, atol=1e-6, rtol=1e-6)

    # --- check 3: bf16 fallback path (pe pre-stored in model dtype) ---------
    pe32_bf16 = make_positional_encoding_buffer(d_model, max_len, dtype=jnp.bfloat16)
    x = jax.random.normal(k3, (32, batch, d_model), dtype=jnp.bfloat16)
    out = jax.block_until_ready(positional_encoding_forward(x, pe32_bf16))
    ref = positional_encoding_ref(x, pe32_bf16)
    assert jnp.allclose(out.astype(jnp.float32), ref.astype(jnp.float32),
                        atol=2e-2, rtol=2e-2)

    # --- check 4: 3-D sublane-broadcast path (D multiple of 128), 2 S-tiles -
    d_model = 128
    pe128 = make_positional_encoding_buffer(d_model, max_len)
    x = jax.random.normal(k4, (16, batch, d_model), dtype=jnp.float32)
    out = jax.block_until_ready(positional_encoding_forward(x, pe128))
    ref = positional_encoding_ref(x, pe128)
    assert jnp.allclose(out, ref, atol=1e-6, rtol=1e-6)

    # --- check 5: 3-D path, short S / wide D -> lane-axis grid split --------
    d_model = 256
    pe256 = make_positional_encoding_buffer(d_model, max_len)
    x = jax.random.normal(k5, (8, batch, d_model), dtype=jnp.float32)
    out = jax.block_until_ready(positional_encoding_forward(x, pe256))
    ref = positional_encoding_ref(x, pe256)
    assert jnp.allclose(out, ref, atol=1e-6, rtol=1e-6)

    print("KERNEL_OK")
</pallas_src>

<mosaic_0001>
module attributes {stable_mosaic.version = 11 : i64} {
  func.func @_pe_add_flat_kernel(%arg0: i32, %arg1: memref<4x128xf32, #tpu.memory_space<vmem>>, %arg2: memref<4x128xf32, #tpu.memory_space<vmem>>, %arg3: memref<4x128xf32, #tpu.memory_space<vmem>>) attributes {dimension_semantics = [#tpu.dimension_semantics<parallel>], iteration_bounds = array<i64: 1>, scalar_prefetch = 0 : i64, scratch_operands = 0 : i64, tpu.core_type = #tpu.core_type<tc>, window_params = [{transform_indices = @transform_0, window_bounds = array<i64: 4, 128>}, {transform_indices = @transform_1, window_bounds = array<i64: 4, 128>}, {transform_indices = @transform_2, window_bounds = array<i64: 4, 128>}]} {
    %c0 = arith.constant 0 : index
    %c0_0 = arith.constant 0 : index
    %0 = vector.load %arg1[%c0, %c0_0] : memref<4x128xf32, #tpu.memory_space<vmem>>, vector<4x128xf32>
    %c0_1 = arith.constant 0 : index
    %c0_2 = arith.constant 0 : index
    %1 = vector.load %arg2[%c0_1, %c0_2] : memref<4x128xf32, #tpu.memory_space<vmem>>, vector<4x128xf32>
    %2 = arith.addf %0, %1 : vector<4x128xf32>
    %c0_3 = arith.constant 0 : index
    %c0_4 = arith.constant 0 : index
    %3 = vector.load %arg3[%c0_3, %c0_4] : memref<4x128xf32, #tpu.memory_space<vmem>>, vector<4x128xf32>
    tpu.vector_store %arg3[%c0_3, %c0_4], %2 {strides = array<i32>} : memref<4x128xf32, #tpu.memory_space<vmem>>, vector<4x128xf32>,
    return
  }
  func.func @transform_0(%arg0: i32) -> (i32, i32) {
    %c0_i32 = arith.constant 0 : i32
    %c0_i32_0 = arith.constant 0 : i32
    return %arg0, %c0_i32 : i32, i32
  }
  func.func @transform_1(%arg0: i32) -> (i32, i32) {
    %c0_i32 = arith.constant 0 : i32
    %c0_i32_0 = arith.constant 0 : i32
    return %arg0, %c0_i32 : i32, i32
  }
  func.func @transform_2(%arg0: i32) -> (i32, i32) {
    %c0_i32 = arith.constant 0 : i32
    %c0_i32_0 = arith.constant 0 : i32
    return %arg0, %c0_i32 : i32, i32
  }
}

</mosaic_0001>

<llo_original>
// kernel: tpu_custom_call.1
$region0: #{tpu_custom_call.1}
  #allocation0 [shape = 'u32[]', space=smem, size = 0x4, offset = 0x4, fixed_abs, tag = 'smem constant byte address 0x4 - core index']
  #allocation1 [shape = 'u32[144,128]{1,0:T(1,128)}', space=vmem, size = 0x12000, scoped, tag = 'internal scratch']
  %s0 = inlined_call_operand.hbm [shape: f32[4,128], index: 0, kind: input, shape index: {}]
  %s1 = inlined_call_operand.hbm [shape: f32[4,128], index: 1, kind: input, shape index: {}]
  %s2 = inlined_call_operand.hbm [shape: f32[4,128], index: 2, kind: output, shape index: {}]
  %s3 = sld [smem:[#allocation0]]
  $region26: #{tpu_custom_call.1} parent=0
    _
  %s5 = ssub.s32 1, %s3
  %s6 = scalar_select 0, %s5, %s3
  $region1: #{tpu_custom_call.1} parent=0
    #allocation2 [shape = 'u8[2048]{0}', space=vmem, size = 0x800, scoped, tag = 'input window, operand 0, single buffered']
    #allocation3 [shape = 's32[1]{0}', space=sflag, size = 0x4, scoped, tag = 'scoped memory for tpu_custom_call.1']
    #allocation4 [shape = 's32[1]{0}', space=sflag, size = 0x4, scoped, tag = 'scoped memory for tpu_custom_call.1']
    #allocation5 [shape = 'u8[2048]{0}', space=vmem, size = 0x800, scoped, tag = 'input window, operand 1, single buffered']
    #allocation6 [shape = 's32[1]{0}', space=sflag, size = 0x4, scoped, tag = 'scoped memory for tpu_custom_call.1']
    #allocation7 [shape = 'u8[2048]{0}', space=vmem, size = 0x800, scoped, tag = 'output window, operand 0, single buffered']
    %7 = vsyncpa [#allocation3], 0
    %8 = vsyncpa [#allocation6], 0
    %9 = vsyncpa [#allocation4], 0
    // Predicated region
    $region2: #{tpu_custom_call.1} parent=1 // pred_check
      _
    $region3: #{tpu_custom_call.1} parent=1 // pred_check_branch
      %11 = sbr.rel (0) target = $region5
    $region4: #{tpu_custom_call.1} parent=1 // pred_region
      %s13 = ssub.s32 64, 64
      %14 = vsyncadd [#allocation3], %s13
      %s16 = sshll.u32 [#allocation2], 4
      %s17 = int_to_ptr.vmem [resolvable:$true] %s16
      %19 = dma.hbm_to_vmem [thread:$0]  %s0, 64, %s17, [#allocation3]
    $region5: #{tpu_custom_call.1} parent=1 // pred_fallthru
      _
    // Predicated region
    $region6: #{tpu_custom_call.1} parent=1 // pred_check
      _
    $region7: #{tpu_custom_call.1} parent=1 // pred_check_branch
      %21 = sbr.rel (0) target = $region9
    $region8: #{tpu_custom_call.1} parent=1 // pred_region
      %s23 = ssub.s32 64, 64
      %24 = vsyncadd [#allocation6], %s23
      %s26 = sshll.u32 [#allocation5], 4
      %s27 = int_to_ptr.vmem [resolvable:$true] %s26
      %29 = dma.hbm_to_vmem [thread:$0]  %s1, 64, %s27, [#allocation6]
    $region9: #{tpu_custom_call.1} parent=1 // pred_fallthru
      _
    // Predicated region
    $region10: #{tpu_custom_call.1} parent=1 // pred_check
      _
    $region11: #{tpu_custom_call.1} parent=1 // pred_check_branch
      %31 = sbr.rel (0) target = $region13
    $region12: #{tpu_custom_call.1} parent=1 // pred_region
      %32 = dma.done [#allocation3], 64
    $region13: #{tpu_custom_call.1} parent=1 // pred_fallthru
      _
    // Predicated region
    $region14: #{tpu_custom_call.1} parent=1 // pred_check
      _
    $region15: #{tpu_custom_call.1} parent=1 // pred_check_branch
      %34 = sbr.rel (0) target = $region17
    $region16: #{tpu_custom_call.1} parent=1 // pred_region
      %35 = dma.done [#allocation6], 64
    $region17: #{tpu_custom_call.1} parent=1 // pred_fallthru
      _
    %v36 = vld [vmem:[#allocation2] sm:$0xf]
    %v37 = vld [vmem:[#allocation5] sm:$0xf]
    %v38 = vadd.f32 %v36, %v37
    %39 = vst [vmem:[#allocation7] sm:$0xf] %v38
    // Predicated region
    $region18: #{tpu_custom_call.1} parent=1 // pred_check
      _
    $region19: #{tpu_custom_call.1} parent=1 // pred_check_branch
      %41 = sbr.rel (0) target = $region21
    $region20: #{tpu_custom_call.1} parent=1 // pred_region
      %s43 = ssub.s32 64, 64
      %44 = vsyncadd [#allocation4], %s43
      %s46 = sshll.u32 [#allocation7], 4
      %s47 = int_to_ptr.vmem [resolvable:$true] %s46
      %49 = dma.vmem_to_hbm [thread:$0]  %s47, 64, %s2, [#allocation4]
    $region21: #{tpu_custom_call.1} parent=1 // pred_fallthru
      _
    // Predicated region
    $region22: #{tpu_custom_call.1} parent=1 // pred_check
      _
    $region23: #{tpu_custom_call.1} parent=1 // pred_check_branch
      %51 = sbr.rel (0) target = $region25
    $region24: #{tpu_custom_call.1} parent=1 // pred_region
      %52 = dma.done [#allocation4], 64
    $region25: #{tpu_custom_call.1} parent=1 // pred_fallthru
      _
    %53 = vsyncpa [#allocation3], 1
    %54 = vsyncpa [#allocation6], 1
    %55 = vsyncpa [#allocation4], 1

</llo_original>
